<compile_context>
chip_gen: v5e
topology: v5e:2x2
jax: 0.10.0
libtpu: 0.0.40
codegen_flags: <defaults>
</compile_context>

<pallas_src>
from typing import NamedTuple, Optional, Tuple

import jax
import jax.numpy as jnp
from jax.experimental import pallas as pl
from jax.experimental.pallas import tpu as pltpu


class SparseTensor(NamedTuple):
    feats: jnp.ndarray
    coords: jnp.ndarray
    stride: Tuple[int, int, int]


_VMEM_LIMIT_BYTES = 48 * 1024 * 1024   # raised scoped-VMEM limit (safe on v5e/v6e/v7x)
_TILE_VMEM_BUDGET = 24 * 1024 * 1024   # double-buffered in + 8x out blocks per tile


def _upsample_kernel(coords_ref, feats_ref, out_coords_ref, out_feats_ref):
    """Reads one row tile once, writes all 8 octants (coords*2+offset, feats copy)."""
    c = coords_ref[...]            # (rc, 128) int32  (or (tile_n, 4) in fallback path)
    f = feats_ref[...]             # (rf, 128) f32    (or (tile_n, C) in fallback path)
    c2 = c * 2

    # In the lane-dense flat layout each 128-lane row packs 32 coordinate rows
    # [b,x,y,z,b,x,y,z,...], so lane & 3 identifies the coordinate column.
    # In the (tile_n, 4) fallback layout the last dim is already 0..3 (& 3 is a no-op).
    lane = jax.lax.broadcasted_iota(jnp.int32, c.shape, 1) & 3
    is_x = (lane == 1).astype(c.dtype)
    is_y = (lane == 2).astype(c.dtype)
    is_z = (lane == 3).astype(c.dtype)

    for o in range(8):                                 # unrolled; i/j/k are Python constants
        i, j, k = (o >> 2) & 1, (o >> 1) & 1, o & 1    # matches nested i/j/k torch.cat order
        oc = c2
        if i:
            oc = oc + is_x
        if j:
            oc = oc + is_y
        if k:
            oc = oc + is_z
        out_coords_ref[o] = oc
        out_feats_ref[o] = f


def _pick_tile_n(N: int, C: int, tile_vmem_budget: int) -> int:
    """VMEM-aware row-tile size for the lane-dense path.

    Constraints for a partial tile: multiple of 256 rows (so the flat coords
    block is a multiple of 8 sublanes) and (tile_n*C) % 1024 == 0 (so the flat
    feats block is a multiple of 8 sublanes). tile_n == N (full extent) is
    always legal.
    """
    def ok(t):
        return t >= 256 and N % t == 0 and t % 256 == 0 and (t * C) % 1024 == 0

    # Bytes per input row across double-buffered {coords, feats} in + 8x out blocks.
    bytes_per_row = 2 * ((4 + C) * 4 + 8 * (4 + C) * 4)
    max_rows = max(256, tile_vmem_budget // bytes_per_row)

    t = min(N, (max_rows // 256) * 256)
    while t >= 256 and not ok(t):
        t -= 256
    if t < 256:
        return N                       # small N: single full-extent tile
    # Prefer >= 2 row tiles so v7x's two TensorCores both get work.
    if t == N and ok(N // 2):
        t = N // 2
    return t


def upsample_generative_pallas(coords, feats, *, tile_n: Optional[int] = None):
    """Hot path: coordinate doubling + octant offsets + 8x feature replication."""
    N, four = coords.shape
    assert four == 4
    C = feats.shape[1]
    cdt, fdt = coords.dtype, feats.dtype

    compiler_params = pltpu.CompilerParams(
        dimension_semantics=("parallel",),
        vmem_limit_bytes=_VMEM_LIMIT_BYTES,
    )

    lane_dense = (N % 32 == 0) and ((N * C) % 128 == 0)

    if lane_dense:
        if tile_n is None:
            tile_n = _pick_tile_n(N, C, _TILE_VMEM_BUDGET)
        assert N % tile_n == 0
        assert tile_n == N or (tile_n % 256 == 0 and (tile_n * C) % 1024 == 0)
        num_tiles = N // tile_n

        Rc, Rf = N * 4 // 128, N * C // 128           # flat (lane-dense) row counts
        rc, rf = tile_n * 4 // 128, tile_n * C // 128

        coords_flat = coords.reshape(Rc, 128)
        feats_flat = feats.reshape(Rf, 128)

        oc_flat, of_flat = pl.pallas_call(
            _upsample_kernel,
            out_shape=(
                jax.ShapeDtypeStruct((8, Rc, 128), cdt),
                jax.ShapeDtypeStruct((8, Rf, 128), fdt),
            ),
            grid=(num_tiles,),
            in_specs=[
                pl.BlockSpec((rc, 128), lambda t: (t, 0)),
                pl.BlockSpec((rf, 128), lambda t: (t, 0)),
            ],
            out_specs=(
                pl.BlockSpec((8, rc, 128), lambda t: (0, t, 0)),
                pl.BlockSpec((8, rf, 128), lambda t: (0, t, 0)),
            ),
            compiler_params=compiler_params,
        )(coords_flat, feats_flat)

        # Contiguous metadata-only reshapes back to the concatenated layout.
        return oc_flat.reshape(8 * N, 4), of_flat.reshape(8 * N, C)

    # Fallback for shapes that don't admit the lane-dense flat view.  Still
    # reads each input tile once and writes all 8 octants from it.
    if tile_n is None:
        tile_n = N
    assert N % tile_n == 0 and (tile_n == N or tile_n % 8 == 0)
    num_tiles = N // tile_n

    oc, of = pl.pallas_call(
        _upsample_kernel,
        out_shape=(
            jax.ShapeDtypeStruct((8, N, 4), cdt),
            jax.ShapeDtypeStruct((8, N, C), fdt),
        ),
        grid=(num_tiles,),
        in_specs=[
            pl.BlockSpec((tile_n, 4), lambda t: (t, 0)),
            pl.BlockSpec((tile_n, C), lambda t: (t, 0)),
        ],
        out_specs=(
            pl.BlockSpec((8, tile_n, 4), lambda t: (0, t, 0)),
            pl.BlockSpec((8, tile_n, C), lambda t: (0, t, 0)),
        ),
        compiler_params=compiler_params,
    )(coords, feats)
    return oc.reshape(8 * N, 4), of.reshape(8 * N, C)


def torchsparse_upsample_generative(
    inp: SparseTensor, mask: Optional[jnp.ndarray] = None
) -> SparseTensor:
    in_stride = inp.stride
    out_stride = tuple(in_stride[k] // 2 for k in range(3))
    C, F = inp.coords, inp.feats
    if mask is not None:
        # Data-dependent output shape; only valid in eager glue (mirrors the
        # PyTorch boolean-indexing semantics, cannot be traced under jit).
        # TODO(synk): replace with a fixed-size / segment formulation if this
        # path ever needs to run under jit.
        keep = jnp.nonzero(mask)[0]
        C, F = C[keep], F[keep]
    out_coords, out_feats = upsample_generative_pallas(C, F)
    return SparseTensor(feats=out_feats, coords=out_coords, stride=out_stride)


def _reference(coords, feats):
    in_coords = coords * 2
    oc, of = [], []
    for i in (0, 1):
        for j in (0, 1):
            for k in (0, 1):
                oc.append(in_coords + jnp.array([[0, i, j, k]], dtype=coords.dtype))
                of.append(feats)
    return jnp.concatenate(oc, axis=0), jnp.concatenate(of, axis=0)


if __name__ == "__main__":
    key = jax.random.PRNGKey(0)
    k1, k2 = jax.random.split(key)

    N, Cfeat = 512, 32
    batch = jnp.zeros((N, 1), dtype=jnp.int32)
    xyz = jax.random.randint(k1, (N, 3), 0, 16, dtype=jnp.int32)
    coords = jnp.concatenate([batch, xyz], axis=1)                 # (N, 4) int32
    feats = jax.random.normal(k2, (N, Cfeat), dtype=jnp.float32)   # (N, C) f32

    inp = SparseTensor(feats=feats, coords=coords, stride=(2, 2, 2))
    out = torchsparse_upsample_generative(inp)
    jax.block_until_ready(out.feats)
    jax.block_until_ready(out.coords)

    ref_coords, ref_feats = _reference(coords, feats)
    assert out.coords.shape == (8 * N, 4) and out.feats.shape == (8 * N, Cfeat)
    assert out.stride == (1, 1, 1)
    assert bool(jnp.all(out.coords == ref_coords))
    assert bool(jnp.allclose(out.feats, ref_feats))

    # Exercise the non-lane-dense fallback path too (N=20 is not a multiple of 32).
    c_small, f_small = coords[:20], feats[:20, :7]
    oc_s, of_s = upsample_generative_pallas(c_small, f_small)
    rc_s, rf_s = _reference(c_small, f_small)
    assert bool(jnp.all(oc_s == rc_s)) and bool(jnp.allclose(of_s, rf_s))

    print("KERNEL_OK")
</pallas_src>

<mosaic_0001>
module attributes {stable_mosaic.version = 11 : i64} {
  func.func @_upsample_kernel(%arg0: i32, %arg1: memref<8x128xi32, #tpu.memory_space<vmem>>, %arg2: memref<64x128xf32, #tpu.memory_space<vmem>>, %arg3: memref<8x8x128xi32, #tpu.memory_space<vmem>>, %arg4: memref<8x64x128xf32, #tpu.memory_space<vmem>>) attributes {dimension_semantics = [#tpu.dimension_semantics<parallel>], iteration_bounds = array<i64: 2>, scalar_prefetch = 0 : i64, scratch_operands = 0 : i64, tpu.core_type = #tpu.core_type<tc>, window_params = [{transform_indices = @transform_0, window_bounds = array<i64: 8, 128>}, {transform_indices = @transform_1, window_bounds = array<i64: 64, 128>}, {transform_indices = @transform_2, window_bounds = array<i64: 8, 8, 128>}, {transform_indices = @transform_3, window_bounds = array<i64: 8, 64, 128>}]} {
    %c0 = arith.constant 0 : index
    %c0_0 = arith.constant 0 : index
    %0 = vector.load %arg1[%c0, %c0_0] : memref<8x128xi32, #tpu.memory_space<vmem>>, vector<8x128xi32>
    %c0_1 = arith.constant 0 : index
    %c0_2 = arith.constant 0 : index
    %1 = vector.load %arg2[%c0_1, %c0_2] : memref<64x128xf32, #tpu.memory_space<vmem>>, vector<64x128xf32>
    %c2_i32 = arith.constant 2 : i32
    %2 = vector.broadcast %c2_i32 : i32 to vector<8x128xi32>
    %3 = arith.muli %0, %2 : vector<8x128xi32>
    %4 = tpu.iota {dimensions = array<i32: 1>} : vector<8x128xi32>
    %c3_i32 = arith.constant 3 : i32
    %5 = vector.broadcast %c3_i32 : i32 to vector<8x128xi32>
    %6 = arith.andi %4, %5 : vector<8x128xi32>
    %c1_i32 = arith.constant 1 : i32
    %7 = vector.broadcast %c1_i32 : i32 to vector<8x128xi32>
    %8 = arith.cmpi eq, %6, %7 : vector<8x128xi32>
    %9 = arith.extui %8 : vector<8x128xi1> to vector<8x128xi32>
    %c2_i32_3 = arith.constant 2 : i32
    %10 = vector.broadcast %c2_i32_3 : i32 to vector<8x128xi32>
    %11 = arith.cmpi eq, %6, %10 : vector<8x128xi32>
    %12 = arith.extui %11 : vector<8x128xi1> to vector<8x128xi32>
    %c3_i32_4 = arith.constant 3 : i32
    %13 = vector.broadcast %c3_i32_4 : i32 to vector<8x128xi32>
    %14 = arith.cmpi eq, %6, %13 : vector<8x128xi32>
    %15 = arith.extui %14 : vector<8x128xi1> to vector<8x128xi32>
    %c0_5 = arith.constant 0 : index
    %c0_6 = arith.constant 0 : index
    %c0_7 = arith.constant 0 : index
    %16 = vector.load %arg3[%c0_5, %c0_6, %c0_7] : memref<8x8x128xi32, #tpu.memory_space<vmem>>, vector<1x8x128xi32>
    %17 = vector.shape_cast %16 : vector<1x8x128xi32> to vector<8x128xi32>
    %18 = vector.shape_cast %3 : vector<8x128xi32> to vector<1x8x128xi32>
    tpu.vector_store %arg3[%c0_5, %c0_6, %c0_7], %18 {strides = array<i32>} : memref<8x8x128xi32, #tpu.memory_space<vmem>>, vector<1x8x128xi32>,
    %c0_8 = arith.constant 0 : index
    %c0_9 = arith.constant 0 : index
    %c0_10 = arith.constant 0 : index
    %19 = vector.load %arg4[%c0_8, %c0_9, %c0_10] : memref<8x64x128xf32, #tpu.memory_space<vmem>>, vector<1x64x128xf32>
    %20 = vector.shape_cast %19 : vector<1x64x128xf32> to vector<64x128xf32>
    %21 = vector.shape_cast %1 : vector<64x128xf32> to vector<1x64x128xf32>
    tpu.vector_store %arg4[%c0_8, %c0_9, %c0_10], %21 {strides = array<i32>} : memref<8x64x128xf32, #tpu.memory_space<vmem>>, vector<1x64x128xf32>,
    %22 = arith.addi %3, %15 : vector<8x128xi32>
    %c1 = arith.constant 1 : index
    %c0_11 = arith.constant 0 : index
    %c0_12 = arith.constant 0 : index
    %23 = vector.load %arg3[%c1, %c0_11, %c0_12] : memref<8x8x128xi32, #tpu.memory_space<vmem>>, vector<1x8x128xi32>
    %24 = vector.shape_cast %23 : vector<1x8x128xi32> to vector<8x128xi32>
    %25 = vector.shape_cast %22 : vector<8x128xi32> to vector<1x8x128xi32>
    tpu.vector_store %arg3[%c1, %c0_11, %c0_12], %25 {strides = array<i32>} : memref<8x8x128xi32, #tpu.memory_space<vmem>>, vector<1x8x128xi32>,
    %c1_13 = arith.constant 1 : index
    %c0_14 = arith.constant 0 : index
    %c0_15 = arith.constant 0 : index
    %26 = vector.load %arg4[%c1_13, %c0_14, %c0_15] : memref<8x64x128xf32, #tpu.memory_space<vmem>>, vector<1x64x128xf32>
    %27 = vector.shape_cast %26 : vector<1x64x128xf32> to vector<64x128xf32>
    %28 = vector.shape_cast %1 : vector<64x128xf32> to vector<1x64x128xf32>
    tpu.vector_store %arg4[%c1_13, %c0_14, %c0_15], %28 {strides = array<i32>} : memref<8x64x128xf32, #tpu.memory_space<vmem>>, vector<1x64x128xf32>,
    %29 = arith.addi %3, %12 : vector<8x128xi32>
    %c2 = arith.constant 2 : index
    %c0_16 = arith.constant 0 : index
    %c0_17 = arith.constant 0 : index
    %30 = vector.load %arg3[%c2, %c0_16, %c0_17] : memref<8x8x128xi32, #tpu.memory_space<vmem>>, vector<1x8x128xi32>
    %31 = vector.shape_cast %30 : vector<1x8x128xi32> to vector<8x128xi32>
    %32 = vector.shape_cast %29 : vector<8x128xi32> to vector<1x8x128xi32>
    tpu.vector_store %arg3[%c2, %c0_16, %c0_17], %32 {strides = array<i32>} : memref<8x8x128xi32, #tpu.memory_space<vmem>>, vector<1x8x128xi32>,
    %c2_18 = arith.constant 2 : index
    %c0_19 = arith.constant 0 : index
    %c0_20 = arith.constant 0 : index
    %33 = vector.load %arg4[%c2_18, %c0_19, %c0_20] : memref<8x64x128xf32, #tpu.memory_space<vmem>>, vector<1x64x128xf32>
    %34 = vector.shape_cast %33 : vector<1x64x128xf32> to vector<64x128xf32>
    %35 = vector.shape_cast %1 : vector<64x128xf32> to vector<1x64x128xf32>
    tpu.vector_store %arg4[%c2_18, %c0_19, %c0_20], %35 {strides = array<i32>} : memref<8x64x128xf32, #tpu.memory_space<vmem>>, vector<1x64x128xf32>,
    %36 = arith.addi %3, %12 : vector<8x128xi32>
    %37 = arith.addi %36, %15 : vector<8x128xi32>
    %c3 = arith.constant 3 : index
    %c0_21 = arith.constant 0 : index
    %c0_22 = arith.constant 0 : index
    %38 = vector.load %arg3[%c3, %c0_21, %c0_22] : memref<8x8x128xi32, #tpu.memory_space<vmem>>, vector<1x8x128xi32>
    %39 = vector.shape_cast %38 : vector<1x8x128xi32> to vector<8x128xi32>
    %40 = vector.shape_cast %37 : vector<8x128xi32> to vector<1x8x128xi32>
    tpu.vector_store %arg3[%c3, %c0_21, %c0_22], %40 {strides = array<i32>} : memref<8x8x128xi32, #tpu.memory_space<vmem>>, vector<1x8x128xi32>,
    %c3_23 = arith.constant 3 : index
    %c0_24 = arith.constant 0 : index
    %c0_25 = arith.constant 0 : index
    %41 = vector.load %arg4[%c3_23, %c0_24, %c0_25] : memref<8x64x128xf32, #tpu.memory_space<vmem>>, vector<1x64x128xf32>
    %42 = vector.shape_cast %41 : vector<1x64x128xf32> to vector<64x128xf32>
    %43 = vector.shape_cast %1 : vector<64x128xf32> to vector<1x64x128xf32>
    tpu.vector_store %arg4[%c3_23, %c0_24, %c0_25], %43 {strides = array<i32>} : memref<8x64x128xf32, #tpu.memory_space<vmem>>, vector<1x64x128xf32>,
    %44 = arith.addi %3, %9 : vector<8x128xi32>
    %c4 = arith.constant 4 : index
    %c0_26 = arith.constant 0 : index
    %c0_27 = arith.constant 0 : index
    %45 = vector.load %arg3[%c4, %c0_26, %c0_27] : memref<8x8x128xi32, #tpu.memory_space<vmem>>, vector<1x8x128xi32>
    %46 = vector.shape_cast %45 : vector<1x8x128xi32> to vector<8x128xi32>
    %47 = vector.shape_cast %44 : vector<8x128xi32> to vector<1x8x128xi32>
    tpu.vector_store %arg3[%c4, %c0_26, %c0_27], %47 {strides = array<i32>} : memref<8x8x128xi32, #tpu.memory_space<vmem>>, vector<1x8x128xi32>,
    %c4_28 = arith.constant 4 : index
    %c0_29 = arith.constant 0 : index
    %c0_30 = arith.constant 0 : index
    %48 = vector.load %arg4[%c4_28, %c0_29, %c0_30] : memref<8x64x128xf32, #tpu.memory_space<vmem>>, vector<1x64x128xf32>
    %49 = vector.shape_cast %48 : vector<1x64x128xf32> to vector<64x128xf32>
    %50 = vector.shape_cast %1 : vector<64x128xf32> to vector<1x64x128xf32>
    tpu.vector_store %arg4[%c4_28, %c0_29, %c0_30], %50 {strides = array<i32>} : memref<8x64x128xf32, #tpu.memory_space<vmem>>, vector<1x64x128xf32>,
    %51 = arith.addi %3, %9 : vector<8x128xi32>
    %52 = arith.addi %51, %15 : vector<8x128xi32>
    %c5 = arith.constant 5 : index
    %c0_31 = arith.constant 0 : index
    %c0_32 = arith.constant 0 : index
    %53 = vector.load %arg3[%c5, %c0_31, %c0_32] : memref<8x8x128xi32, #tpu.memory_space<vmem>>, vector<1x8x128xi32>
    %54 = vector.shape_cast %53 : vector<1x8x128xi32> to vector<8x128xi32>
    %55 = vector.shape_cast %52 : vector<8x128xi32> to vector<1x8x128xi32>
    tpu.vector_store %arg3[%c5, %c0_31, %c0_32], %55 {strides = array<i32>} : memref<8x8x128xi32, #tpu.memory_space<vmem>>, vector<1x8x128xi32>,
    %c5_33 = arith.constant 5 : index
    %c0_34 = arith.constant 0 : index
    %c0_35 = arith.constant 0 : index
    %56 = vector.load %arg4[%c5_33, %c0_34, %c0_35] : memref<8x64x128xf32, #tpu.memory_space<vmem>>, vector<1x64x128xf32>
    %57 = vector.shape_cast %56 : vector<1x64x128xf32> to vector<64x128xf32>
    %58 = vector.shape_cast %1 : vector<64x128xf32> to vector<1x64x128xf32>
    tpu.vector_store %arg4[%c5_33, %c0_34, %c0_35], %58 {strides = array<i32>} : memref<8x64x128xf32, #tpu.memory_space<vmem>>, vector<1x64x128xf32>,
    %59 = arith.addi %3, %9 : vector<8x128xi32>
    %60 = arith.addi %59, %12 : vector<8x128xi32>
    %c6 = arith.constant 6 : index
    %c0_36 = arith.constant 0 : index
    %c0_37 = arith.constant 0 : index
    %61 = vector.load %arg3[%c6, %c0_36, %c0_37] : memref<8x8x128xi32, #tpu.memory_space<vmem>>, vector<1x8x128xi32>
    %62 = vector.shape_cast %61 : vector<1x8x128xi32> to vector<8x128xi32>
    %63 = vector.shape_cast %60 : vector<8x128xi32> to vector<1x8x128xi32>
    tpu.vector_store %arg3[%c6, %c0_36, %c0_37], %63 {strides = array<i32>} : memref<8x8x128xi32, #tpu.memory_space<vmem>>, vector<1x8x128xi32>,
    %c6_38 = arith.constant 6 : index
    %c0_39 = arith.constant 0 : index
    %c0_40 = arith.constant 0 : index
    %64 = vector.load %arg4[%c6_38, %c0_39, %c0_40] : memref<8x64x128xf32, #tpu.memory_space<vmem>>, vector<1x64x128xf32>
    %65 = vector.shape_cast %64 : vector<1x64x128xf32> to vector<64x128xf32>
    %66 = vector.shape_cast %1 : vector<64x128xf32> to vector<1x64x128xf32>
    tpu.vector_store %arg4[%c6_38, %c0_39, %c0_40], %66 {strides = array<i32>} : memref<8x64x128xf32, #tpu.memory_space<vmem>>, vector<1x64x128xf32>,
    %67 = arith.addi %3, %9 : vector<8x128xi32>
    %68 = arith.addi %67, %12 : vector<8x128xi32>
    %69 = arith.addi %68, %15 : vector<8x128xi32>
    %c7 = arith.constant 7 : index
    %c0_41 = arith.constant 0 : index
    %c0_42 = arith.constant 0 : index
    %70 = vector.load %arg3[%c7, %c0_41, %c0_42] : memref<8x8x128xi32, #tpu.memory_space<vmem>>, vector<1x8x128xi32>
    %71 = vector.shape_cast %70 : vector<1x8x128xi32> to vector<8x128xi32>
    %72 = vector.shape_cast %69 : vector<8x128xi32> to vector<1x8x128xi32>
    tpu.vector_store %arg3[%c7, %c0_41, %c0_42], %72 {strides = array<i32>} : memref<8x8x128xi32, #tpu.memory_space<vmem>>, vector<1x8x128xi32>,
    %c7_43 = arith.constant 7 : index
    %c0_44 = arith.constant 0 : index
    %c0_45 = arith.constant 0 : index
    %73 = vector.load %arg4[%c7_43, %c0_44, %c0_45] : memref<8x64x128xf32, #tpu.memory_space<vmem>>, vector<1x64x128xf32>
    %74 = vector.shape_cast %73 : vector<1x64x128xf32> to vector<64x128xf32>
    %75 = vector.shape_cast %1 : vector<64x128xf32> to vector<1x64x128xf32>
    tpu.vector_store %arg4[%c7_43, %c0_44, %c0_45], %75 {strides = array<i32>} : memref<8x64x128xf32, #tpu.memory_space<vmem>>, vector<1x64x128xf32>,
    return
  }
  func.func @transform_0(%arg0: i32) -> (i32, i32) {
    %c0_i32 = arith.constant 0 : i32
    %c0_i32_0 = arith.constant 0 : i32
    return %arg0, %c0_i32 : i32, i32
  }
  func.func @transform_1(%arg0: i32) -> (i32, i32) {
    %c0_i32 = arith.constant 0 : i32
    %c0_i32_0 = arith.constant 0 : i32
    return %arg0, %c0_i32 : i32, i32
  }
  func.func @transform_2(%arg0: i32) -> (i32, i32, i32) {
    %c0_i32 = arith.constant 0 : i32
    %c0_i32_0 = arith.constant 0 : i32
    %c0_i32_1 = arith.constant 0 : i32
    return %c0_i32, %arg0, %c0_i32_0 : i32, i32, i32
  }
  func.func @transform_3(%arg0: i32) -> (i32, i32, i32) {
    %c0_i32 = arith.constant 0 : i32
    %c0_i32_0 = arith.constant 0 : i32
    %c0_i32_1 = arith.constant 0 : i32
    return %c0_i32, %arg0, %c0_i32_0 : i32, i32, i32
  }
}

</mosaic_0001>

<llo_original>
// kernel: tpu_custom_call.1
$region0: #{tpu_custom_call.1}
  #allocation0 [shape = 'u32[]', space=smem, size = 0x4, offset = 0x4, fixed_abs, tag = 'smem constant byte address 0x4 - core index']
  #allocation1 [shape = 'u32[72,128]{1,0:T(1,128)}', space=vmem, size = 0x9000, scoped, tag = 'internal scratch']
  #allocation10 [shape = 's32[]', space=sflag, size = 0x4, offset = 0, fixed_abs, tag = 'sflag constant byte address 0x0 - dummy sync flag']
  %s0 = inlined_call_operand.hbm [shape: s32[16,128], index: 0, kind: input, shape index: {}]
  %s1 = inlined_call_operand.hbm [shape: f32[128,128], index: 1, kind: input, shape index: {}]
  %s2 = inlined_call_operand.hbm [shape: s32[8,16,128], index: 2, kind: output, shape index: {0}]
  %s3 = inlined_call_operand.hbm [shape: f32[8,128,128], index: 3, kind: output, shape index: {1}]
  %4 = xla_tuple %s2, %s3
  %s5 = sld [smem:[#allocation0]]
  $region57: #{tpu_custom_call.1} parent=0
    _
  %s7 = ssub.s32 1, %s5
  %s8 = scalar_select 0, %s7, %s5
  $region1: #{tpu_custom_call.1} parent=0
    #allocation2 [shape = 'u8[8192]{0}', space=vmem, size = 0x2000, scoped, tag = 'input window, operand 0']
    #allocation3 [shape = 's32[2]{0}', space=sflag, size = 0x8, scoped, tag = 'scoped memory for tpu_custom_call.1']
    #allocation4 [shape = 's32[2]{0}', space=sflag, size = 0x8, scoped, tag = 'scoped memory for tpu_custom_call.1']
    #allocation5 [shape = 'u8[65536]{0}', space=vmem, size = 0x10000, scoped, tag = 'input window, operand 1']
    #allocation6 [shape = 's32[2]{0}', space=sflag, size = 0x8, scoped, tag = 'scoped memory for tpu_custom_call.1']
    #allocation7 [shape = 'u8[65536]{0}', space=vmem, size = 0x10000, scoped, tag = 'output window, operand 0']
    #allocation8 [shape = 'u8[524288]{0}', space=vmem, size = 0x80000, scoped, tag = 'output window, operand 1']
    #allocation9 [shape = 's32[2]{0}', space=sflag, size = 0x8, scoped, tag = 'scoped memory for tpu_custom_call.1']
    %9 = vsyncpa [#allocation3], 0
    %s10 = scalar_lea.sflag [#allocation3], 1
    %11 = vsyncpa %s10, 0
    %12 = vsyncpa [#allocation6], 0
    %s13 = scalar_lea.sflag [#allocation6], 1
    %14 = vsyncpa %s13, 0
    %15 = vsyncpa [#allocation4], 0
    %s16 = scalar_lea.sflag [#allocation4], 1
    %17 = vsyncpa %s16, 0
    %18 = vsyncpa [#allocation9], 0
    %s19 = scalar_lea.sflag [#allocation9], 1
    %20 = vsyncpa %s19, 0
    loop: start=0, step=1, limit=4
    $region2: #{tpu_custom_call.1} parent=1 // loop_pre_header
      _
    $region3: #{tpu_custom_call.1} parent=1 // loop_header
      %s22 = sphi 0, %s26
      %p23 = scmp.ge.s32.totalorder %s22, 4
      %s32 = sphi 0, %s34
      %s35 = sphi 0, %s32
      %s36 = sphi 0, %s35
      %s52 = sphi 0, %s36
      %s58 = sphi 0, %s60
      %s61 = sphi 0, %s58
      %s62 = sphi 0, %s61
      %s78 = sphi 0, %s62
      %s84 = sphi 0, %s86
      %s87 = sphi 0, %s84
      %s88 = sphi 0, %s87
      %s104 = sphi 0, %s88
      %s110 = sphi 0, %s112
      %s113 = sphi 0, %s110
      %s114 = sphi 0, %s113
      %s130 = sphi 0, %s114
    $region4: #{tpu_custom_call.1} parent=1 // loop_header_branch
      %25 = sbr.rel (%p23) target = $region8
    $region5: #{tpu_custom_call.1} parent=1 // loop_body
      %s27 = ssub.s32 %s22, 1
      %s28 = ssub.s32 %s22, 2
      %s29 = sadd.s32 %s22, 1
      %s30 = ssub.s32 %s22, %s29
      %p31 = scmp.eq.s32.totalorder %s30, 0
      %s33 = sadd.s32 %s32, 1
      %s34 = scalar_select %p31, %s32, %s33
      %p37 = pneg %p31
      %p38 = scmp.eq.s32.totalorder %s22, 1
      %p39 = por %p37, %p38
      %p40 = scmp.ne.s32.totalorder %s32, %s35
      %p41 = scmp.eq.s32.totalorder %s22, 0
      %p42 = por %p40, %p41
      %p43 = scmp.ne.s32.totalorder %s32, %s35
      %p44 = scmp.eq.s32.totalorder %s27, 1
      %p45 = por %p43, %p44
      %p46 = scmp.ne.s32.totalorder %s35, %s36
      %p47 = scmp.eq.s32.totalorder %s27, 0
      %p48 = por %p46, %p47
      %p49 = scmp.ne.s32.totalorder %s35, %s36
      %p50 = scmp.eq.s32.totalorder %s28, 1
      %p51 = por %p49, %p50
      %p53 = scmp.ne.s32.totalorder %s36, %s52
      %p54 = scmp.eq.s32.totalorder %s28, 0
      %p55 = por %p53, %p54
      %s56 = ssub.s32 %s22, %s29
      %p57 = scmp.eq.s32.totalorder %s56, 0
      %s59 = sadd.s32 %s58, 1
      %s60 = scalar_select %p57, %s58, %s59
      %p63 = pneg %p57
      %p64 = scmp.eq.s32.totalorder %s22, 1
      %p65 = por %p63, %p64
      %p66 = scmp.ne.s32.totalorder %s58, %s61
      %p67 = scmp.eq.s32.totalorder %s22, 0
      %p68 = por %p66, %p67
      %p69 = scmp.ne.s32.totalorder %s58, %s61
      %p70 = scmp.eq.s32.totalorder %s27, 1
      %p71 = por %p69, %p70
      %p72 = scmp.ne.s32.totalorder %s61, %s62
      %p73 = scmp.eq.s32.totalorder %s27, 0
      %p74 = por %p72, %p73
      %p75 = scmp.ne.s32.totalorder %s61, %s62
      %p76 = scmp.eq.s32.totalorder %s28, 1
      %p77 = por %p75, %p76
      %p79 = scmp.ne.s32.totalorder %s62, %s78
      %p80 = scmp.eq.s32.totalorder %s28, 0
      %p81 = por %p79, %p80
      %s82 = ssub.s32 %s22, %s29
      %p83 = scmp.eq.s32.totalorder %s82, 0
      %s85 = sadd.s32 %s84, 1
      %s86 = scalar_select %p83, %s84, %s85
      %p89 = pneg %p83
      %p90 = scmp.eq.s32.totalorder %s22, 1
      %p91 = por %p89, %p90
      %p92 = scmp.ne.s32.totalorder %s84, %s87
      %p93 = scmp.eq.s32.totalorder %s22, 0
      %p94 = por %p92, %p93
      %p95 = scmp.ne.s32.totalorder %s84, %s87
      %p96 = scmp.eq.s32.totalorder %s27, 1
      %p97 = por %p95, %p96
      %p98 = scmp.ne.s32.totalorder %s87, %s88
      %p99 = scmp.eq.s32.totalorder %s27, 0
      %p100 = por %p98, %p99
      %p101 = scmp.ne.s32.totalorder %s87, %s88
      %p102 = scmp.eq.s32.totalorder %s28, 1
      %p103 = por %p101, %p102
      %p105 = scmp.ne.s32.totalorder %s88, %s104
      %p106 = scmp.eq.s32.totalorder %s28, 0
      %p107 = por %p105, %p106
      %s108 = ssub.s32 %s22, %s29
      %p109 = scmp.eq.s32.totalorder %s108, 0
      %s111 = sadd.s32 %s110, 1
      %s112 = scalar_select %p109, %s110, %s111
      %p115 = pneg %p109
      %p116 = scmp.eq.s32.totalorder %s22, 1
      %p117 = por %p115, %p116
      %p118 = scmp.ne.s32.totalorder %s110, %s113
      %p119 = scmp.eq.s32.totalorder %s22, 0
      %p120 = por %p118, %p119
      %p121 = scmp.ne.s32.totalorder %s110, %s113
      %p122 = scmp.eq.s32.totalorder %s27, 1
      %p123 = por %p121, %p122
      %p124 = scmp.ne.s32.totalorder %s113, %s114
      %p125 = scmp.eq.s32.totalorder %s27, 0
      %p126 = por %p124, %p125
      %p127 = scmp.ne.s32.totalorder %s113, %s114
      %p128 = scmp.eq.s32.totalorder %s28, 1
      %p129 = por %p127, %p128
      %p131 = scmp.ne.s32.totalorder %s114, %s130
      %p132 = scmp.eq.s32.totalorder %s28, 0
      %p133 = por %p131, %p132
      %p134 = scmp.le.s32.totalorder 1, %s22
      %p135 = scmp.lt.s32.totalorder %s22, 3
      %p136 = pnand %p134, %p135
      %p137 = pneg %p136
      // Predicated region
      $region9: #{tpu_custom_call.1} parent=5 // pred_check
        _
      $region10: #{tpu_custom_call.1} parent=5 // pred_check_branch
        %139 = sbr.rel (%p136) target = $region12
      $region11: #{tpu_custom_call.1} parent=5 // pred_region
        %s140 = ssub.s32 %s22, 1
      $region12: #{tpu_custom_call.1} parent=5 // pred_fallthru
        _
      %p141 = scmp.lt.s32.totalorder %s22, 2
      // Predicated region
      $region13: #{tpu_custom_call.1} parent=5 // pred_check
        %p142 = pneg %p141
      $region14: #{tpu_custom_call.1} parent=5 // pred_check_branch
        %144 = sbr.rel (%p142) target = $region16
      $region15: #{tpu_custom_call.1} parent=5 // pred_region
        // Predicated region
        $region17: #{tpu_custom_call.1} parent=15 // pred_check
          %p145 = pneg %p42
        $region18: #{tpu_custom_call.1} parent=15 // pred_check_branch
          %147 = sbr.rel (%p145) target = $region20
        $region19: #{tpu_custom_call.1} parent=15 // pred_region
          %s148 = sand.u32 %s32, 1
          %s149 = scalar_lea.sflag [#allocation3], %s148
          %s150 = sand.u32 %s32, 1
          %s151 = smul.addr %s150, 8
          %s152 = scalar_lea.vmem [#allocation2], %s151
          %154 = vsyncadd %s149, 0
          %s155 = smul.addr %s22, 8
          %s156 = scalar_lea.hbm %s0, %s155
          %s158 = sshll.u32 %s156, 4
          %s159 = int_to_ptr.hbm [resolvable:$true] %s158
          %s160 = sshll.u32 %s152, 4
          %s161 = int_to_ptr.vmem [resolvable:$true] %s160
          %163 = dma.hbm_to_vmem [thread:$0]  %s159, 128, %s161, %s149
        $region20: #{tpu_custom_call.1} parent=15 // pred_fallthru
          _
        // Predicated region
        $region21: #{tpu_custom_call.1} parent=15 // pred_check
          %p164 = pneg %p68
        $region22: #{tpu_custom_call.1} parent=15 // pred_check_branch
          %166 = sbr.rel (%p164) target = $region24
        $region23: #{tpu_custom_call.1} parent=15 // pred_region
          %s167 = sand.u32 %s58, 1
          %s168 = scalar_lea.sflag [#allocation6], %s167
          %s169 = sand.u32 %s58, 1
          %s170 = smul.addr %s169, 64
          %s171 = scalar_lea.vmem [#allocation5], %s170
          %s172 = smul.u32 8, %s22
          %174 = vsyncadd %s168, 0
          %s175 = smul.addr %s172, 8
          %s176 = scalar_lea.hbm %s1, %s175
          %s177 = sshll.u32 %s176, 4
          %s178 = int_to_ptr.hbm [resolvable:$true] %s177
          %s179 = sshll.u32 %s171, 4
          %s180 = int_to_ptr.vmem [resolvable:$true] %s179
          %185 = dma.hbm_to_vmem [thread:$0]  %s178, 1024, %s180, %s168, 128, 128, 8
        $region24: #{tpu_custom_call.1} parent=15 // pred_fallthru
          _
      $region16: #{tpu_custom_call.1} parent=5 // pred_fallthru
        _
      %p186 = scmp.le.s32.totalorder 1, %s22
      %p187 = scmp.lt.s32.totalorder %s22, 3
      %p188 = pnand %p186, %p187
      %p189 = pneg %p188
      // Predicated region
      $region25: #{tpu_custom_call.1} parent=5 // pred_check
        _
      $region26: #{tpu_custom_call.1} parent=5 // pred_check_branch
        %191 = sbr.rel (%p188) target = $region28
      $region27: #{tpu_custom_call.1} parent=5 // pred_region
        %s192 = ssub.s32 %s22, 1
        %s193 = sand.u32 %s35, 1
        %s194 = scalar_lea.sflag [#allocation3], %s193
        %s195 = sand.u32 %s35, 1
        %s196 = smul.addr %s195, 8
        %s197 = scalar_lea.vmem [#allocation2], %s196
        // Predicated region
        $region29: #{tpu_custom_call.1} parent=27 // pred_check
          %p198 = pneg %p48
        $region30: #{tpu_custom_call.1} parent=27 // pred_check_branch
          %200 = sbr.rel (%p198) target = $region32
        $region31: #{tpu_custom_call.1} parent=27 // pred_region
          %202 = dma.done %s194, 128
        $region32: #{tpu_custom_call.1} parent=27 // pred_fallthru
          _
        %s203 = sand.u32 %s61, 1
        %s204 = scalar_lea.sflag [#allocation6], %s203
        %s205 = sand.u32 %s61, 1
        %s206 = smul.addr %s205, 64
        %s207 = scalar_lea.vmem [#allocation5], %s206
        // Predicated region
        $region33: #{tpu_custom_call.1} parent=27 // pred_check
          %p208 = pneg %p74
        $region34: #{tpu_custom_call.1} parent=27 // pred_check_branch
          %210 = sbr.rel (%p208) target = $region36
        $region35: #{tpu_custom_call.1} parent=27 // pred_region
          %212 = dma.done %s204, 1024
        $region36: #{tpu_custom_call.1} parent=27 // pred_fallthru
          _
        %s213 = sand.u32 %s35, 1
        %s214 = scalar_lea.sflag [#allocation3], %s213
        %s215 = sand.u32 %s35, 1
        %s216 = smul.addr %s215, 8
        %s217 = scalar_lea.vmem [#allocation2], %s216
        %p218 = pneg %p48
        %p219 = pneg %p45
        %s220 = sand.u32 %s61, 1
        %s221 = scalar_lea.sflag [#allocation6], %s220
        %s222 = sand.u32 %s61, 1
        %s223 = smul.addr %s222, 64
        %s224 = scalar_lea.vmem [#allocation5], %s223
        %p225 = pneg %p74
        %p226 = pneg %p71
        %p227 = pneg %p100
        %p228 = pneg %p97
        %s229 = sand.u32 %s87, 1
        %s230 = scalar_lea.sflag [#allocation4], %s229
        %s231 = sand.u32 %s87, 1
        %s232 = smul.addr %s231, 64
        %s233 = scalar_lea.vmem [#allocation7], %s232
        %p234 = pneg %p126
        %p235 = pneg %p123
        %s236 = sand.u32 %s113, 1
        %s237 = scalar_lea.sflag [#allocation9], %s236
        %s238 = sand.u32 %s113, 1
        %s239 = smul.addr %s238, 512
        %s240 = scalar_lea.vmem [#allocation8], %s239
        %s241 = smul.u32 8, %s27
        %s242 = smul.u32 8, %s27
        %v243 = vld [vmem:[%s197] sm:$0xff]
        %v244 = vld [vmem:[%s207] sm:$0xff]
        %v245 = vld [vmem:[%s207 + $0x8] sm:$0xff]
        %v246 = vld [vmem:[%s207 + $0x10] sm:$0xff]
        %v247 = vld [vmem:[%s207 + $0x18] sm:$0xff]
        %v248 = vld [vmem:[%s207 + $0x20] sm:$0xff]
        %v249 = vld [vmem:[%s207 + $0x28] sm:$0xff]
        %v250 = vld [vmem:[%s207 + $0x30] sm:$0xff]
        %v251 = vld [vmem:[%s207 + $0x38] sm:$0xff]
        %v252 = vmul.u32 %v243, 2
        %v253 = vlaneseq
        %v254 = vand.u32 %v253, 127
        %v255 = vand.u32 %v254, 3
        %vm256 = vcmp.eq.s32.totalorder %v255, 1
        %v257 = vsel %vm256, 1, 0
        %vm258 = vcmp.eq.s32.totalorder %v255, 2
        %v259 = vsel %vm258, 1, 0
        %vm260 = vcmp.eq.s32.totalorder %v255, 3
        %v261 = vsel %vm260, 1, 0
        %262 = vst [vmem:[%s233] sm:$0xff] %v252
        %263 = vst [vmem:[%s240] sm:$0xff] %v244
        %264 = vst [vmem:[%s240 + $0x8] sm:$0xff] %v245
        %265 = vst [vmem:[%s240 + $0x10] sm:$0xff] %v246
        %266 = vst [vmem:[%s240 + $0x18] sm:$0xff] %v247
        %267 = vst [vmem:[%s240 + $0x20] sm:$0xff] %v248
        %268 = vst [vmem:[%s240 + $0x28] sm:$0xff] %v249
        %269 = vst [vmem:[%s240 + $0x30] sm:$0xff] %v250
        %270 = vst [vmem:[%s240 + $0x38] sm:$0xff] %v251
        %v271 = vadd.s32 %v252, %v261
        %s272 = scalar_lea.vmem %s233, 8 [#allocation7]
        %273 = vst [vmem:[%s272] sm:$0xff] %v271
        %s274 = scalar_lea.vmem %s240, 64 [#allocation8]
        %275 = vst [vmem:[%s274] sm:$0xff] %v244
        %276 = vst [vmem:[%s274 + $0x8] sm:$0xff] %v245
        %277 = vst [vmem:[%s274 + $0x10] sm:$0xff] %v246
        %278 = vst [vmem:[%s274 + $0x18] sm:$0xff] %v247
        %279 = vst [vmem:[%s274 + $0x20] sm:$0xff] %v248
        %280 = vst [vmem:[%s274 + $0x28] sm:$0xff] %v249
        %281 = vst [vmem:[%s274 + $0x30] sm:$0xff] %v250
        %282 = vst [vmem:[%s274 + $0x38] sm:$0xff] %v251
        %v283 = vadd.s32 %v252, %v259
        %s284 = scalar_lea.vmem %s233, 16 [#allocation7]
        %285 = vst [vmem:[%s284] sm:$0xff] %v283
        %s286 = scalar_lea.vmem %s240, 128 [#allocation8]
        %287 = vst [vmem:[%s286] sm:$0xff] %v244
        %288 = vst [vmem:[%s286 + $0x8] sm:$0xff] %v245
        %289 = vst [vmem:[%s286 + $0x10] sm:$0xff] %v246
        %290 = vst [vmem:[%s286 + $0x18] sm:$0xff] %v247
        %291 = vst [vmem:[%s286 + $0x20] sm:$0xff] %v248
        %292 = vst [vmem:[%s286 + $0x28] sm:$0xff] %v249
        %293 = vst [vmem:[%s286 + $0x30] sm:$0xff] %v250
        %294 = vst [vmem:[%s286 + $0x38] sm:$0xff] %v251
        %v295 = vadd.s32 %v283, %v261
        %s296 = scalar_lea.vmem %s233, 24 [#allocation7]
        %297 = vst [vmem:[%s296] sm:$0xff] %v295
        %s298 = scalar_lea.vmem %s240, 192 [#allocation8]
        %299 = vst [vmem:[%s298] sm:$0xff] %v244
        %300 = vst [vmem:[%s298 + $0x8] sm:$0xff] %v245
        %301 = vst [vmem:[%s298 + $0x10] sm:$0xff] %v246
        %302 = vst [vmem:[%s298 + $0x18] sm:$0xff] %v247
        %303 = vst [vmem:[%s298 + $0x20] sm:$0xff] %v248
        %304 = vst [vmem:[%s298 + $0x28] sm:$0xff] %v249
        %305 = vst [vmem:[%s298 + $0x30] sm:$0xff] %v250
        %306 = vst [vmem:[%s298 + $0x38] sm:$0xff] %v251
        %v307 = vadd.s32 %v252, %v257
        %s308 = scalar_lea.vmem %s233, 32 [#allocation7]
        %309 = vst [vmem:[%s308] sm:$0xff] %v307
        %s310 = scalar_lea.vmem %s240, 256 [#allocation8]
        %311 = vst [vmem:[%s310] sm:$0xff] %v244
        %312 = vst [vmem:[%s310 + $0x8] sm:$0xff] %v245
        %313 = vst [vmem:[%s310 + $0x10] sm:$0xff] %v246
        %314 = vst [vmem:[%s310 + $0x18] sm:$0xff] %v247
        %315 = vst [vmem:[%s310 + $0x20] sm:$0xff] %v248
        %316 = vst [vmem:[%s310 + $0x28] sm:$0xff] %v249
        %317 = vst [vmem:[%s310 + $0x30] sm:$0xff] %v250
        %318 = vst [vmem:[%s310 + $0x38] sm:$0xff] %v251
        %v319 = vadd.s32 %v307, %v261
        %s320 = scalar_lea.vmem %s233, 40 [#allocation7]
        %321 = vst [vmem:[%s320] sm:$0xff] %v319
        %s322 = scalar_lea.vmem %s240, 320 [#allocation8]
        %323 = vst [vmem:[%s322] sm:$0xff] %v244
        %324 = vst [vmem:[%s322 + $0x8] sm:$0xff] %v245
        %325 = vst [vmem:[%s322 + $0x10] sm:$0xff] %v246
        %326 = vst [vmem:[%s322 + $0x18] sm:$0xff] %v247
        %327 = vst [vmem:[%s322 + $0x20] sm:$0xff] %v248
        %328 = vst [vmem:[%s322 + $0x28] sm:$0xff] %v249
        %329 = vst [vmem:[%s322 + $0x30] sm:$0xff] %v250
        %330 = vst [vmem:[%s322 + $0x38] sm:$0xff] %v251
        %v331 = vadd.s32 %v307, %v259
        %s332 = scalar_lea.vmem %s233, 48 [#allocation7]
        %333 = vst [vmem:[%s332] sm:$0xff] %v331
        %s334 = scalar_lea.vmem %s240, 384 [#allocation8]
        %335 = vst [vmem:[%s334] sm:$0xff] %v244
        %336 = vst [vmem:[%s334 + $0x8] sm:$0xff] %v245
        %337 = vst [vmem:[%s334 + $0x10] sm:$0xff] %v246
        %338 = vst [vmem:[%s334 + $0x18] sm:$0xff] %v247
        %339 = vst [vmem:[%s334 + $0x20] sm:$0xff] %v248
        %340 = vst [vmem:[%s334 + $0x28] sm:$0xff] %v249
        %341 = vst [vmem:[%s334 + $0x30] sm:$0xff] %v250
        %342 = vst [vmem:[%s334 + $0x38] sm:$0xff] %v251
        %v343 = vadd.s32 %v331, %v261
        %s344 = scalar_lea.vmem %s233, 56 [#allocation7]
        %345 = vst [vmem:[%s344] sm:$0xff] %v343
        %s346 = scalar_lea.vmem %s240, 448 [#allocation8]
        %347 = vst [vmem:[%s346] sm:$0xff] %v244
        %348 = vst [vmem:[%s346 + $0x8] sm:$0xff] %v245
        %349 = vst [vmem:[%s346 + $0x10] sm:$0xff] %v246
        %350 = vst [vmem:[%s346 + $0x18] sm:$0xff] %v247
        %351 = vst [vmem:[%s346 + $0x20] sm:$0xff] %v248
        %352 = vst [vmem:[%s346 + $0x28] sm:$0xff] %v249
        %353 = vst [vmem:[%s346 + $0x30] sm:$0xff] %v250
        %354 = vst [vmem:[%s346 + $0x38] sm:$0xff] %v251
        %s355 = sand.u32 %s87, 1
        %s356 = scalar_lea.sflag [#allocation4], %s355
        %s357 = sand.u32 %s87, 1
        %s358 = smul.addr %s357, 64
        %s359 = scalar_lea.vmem [#allocation7], %s358
        %s360 = sand.u32 %s113, 1
        %s361 = scalar_lea.sflag [#allocation9], %s360
        %s362 = sand.u32 %s113, 1
        %s363 = smul.addr %s362, 512
        %s364 = scalar_lea.vmem [#allocation8], %s363
        // Predicated region
        $region37: #{tpu_custom_call.1} parent=27 // pred_check
          %p365 = pneg %p97
        $region38: #{tpu_custom_call.1} parent=27 // pred_check_branch
          %367 = sbr.rel (%p365) target = $region40
        $region39: #{tpu_custom_call.1} parent=27 // pred_region
          %369 = vsyncadd %s356, 0
          %s370 = smul.addr %s27, 8
          %s371 = scalar_lea.hbm %s2, %s370
          %s372 = sshll.u32 %s359, 4
          %s373 = int_to_ptr.vmem [resolvable:$true] %s372
          %s374 = sshll.u32 %s371, 4
          %s375 = int_to_ptr.hbm [resolvable:$true] %s374
          %380 = dma.vmem_to_hbm [thread:$0]  %s373, 1024, %s375, %s356, 128, 256, 8
        $region40: #{tpu_custom_call.1} parent=27 // pred_fallthru
          _
        // Predicated region
        $region41: #{tpu_custom_call.1} parent=27 // pred_check
          %p381 = pneg %p123
        $region42: #{tpu_custom_call.1} parent=27 // pred_check_branch
          %383 = sbr.rel (%p381) target = $region44
        $region43: #{tpu_custom_call.1} parent=27 // pred_region
          #allocation11 [shape = 'u32[6]{0}', space=smem, size = 0x18, scoped, tag = 'DMA stride descriptor']
          %s384 = smul.u32 8, %s27
          %386 = vsyncadd %s361, 0
          %s387 = smul.addr %s384, 8
          %s388 = scalar_lea.hbm %s3, %s387
          %s390 = sshll.u32 1, 14
          %s391 = sxor.u32 4294967295, %s390
          %s394 = sshll.u32 7, 18
          %s395 = sxor.u32 4294967295, %s394
          %s396 = sand.u32 0, %s395
          %s398 = sor.u32 %s396, 0
          %s399 = sshll.u32 %s364, 4
          %s400 = int_to_ptr.vmem [resolvable:$true] %s399
          %s401 = sshll.u32 %s388, 4
          %s402 = int_to_ptr.hbm [resolvable:$true] %s401
          %408 = sst [smem:[#allocation11]] 1024
          %s409 = scalar_lea.smem [#allocation11], 1
          %410 = sst [smem:[%s409]] 2048
          %s411 = scalar_lea.smem [#allocation11], 2
          %412 = sst [smem:[%s411]] 8
          %s413 = scalar_lea.smem [#allocation11], 3
          %414 = sst [smem:[%s413]] 128
          %s415 = scalar_lea.smem [#allocation11], 4
          %416 = sst [smem:[%s415]] 128
          %s417 = scalar_lea.smem [#allocation11], 5
          %418 = sst [smem:[%s417]] 8
          %420 = dma.general %s400, 8192, %s402, %s361, [#allocation10], [#allocation11], %s398, 0
        $region44: #{tpu_custom_call.1} parent=27 // pred_fallthru
          _
      $region28: #{tpu_custom_call.1} parent=5 // pred_fallthru
        _
      %p421 = scmp.le.s32.totalorder 2, %s22
      // Predicated region
      $region45: #{tpu_custom_call.1} parent=5 // pred_check
        %p422 = pneg %p421
      $region46: #{tpu_custom_call.1} parent=5 // pred_check_branch
        %424 = sbr.rel (%p422) target = $region48
      $region47: #{tpu_custom_call.1} parent=5 // pred_region
        %s425 = ssub.s32 %s22, 2
        // Predicated region
        $region49: #{tpu_custom_call.1} parent=47 // pred_check
          %p426 = pneg %p103
        $region50: #{tpu_custom_call.1} parent=47 // pred_check_branch
          %428 = sbr.rel (%p426) target = $region52
        $region51: #{tpu_custom_call.1} parent=47 // pred_region
          %s429 = sand.u32 %s88, 1
          %s430 = scalar_lea.sflag [#allocation4], %s429
          %s431 = sand.u32 %s88, 1
          %s432 = smul.addr %s431, 64
          %s433 = scalar_lea.vmem [#allocation7], %s432
          %435 = dma.done %s430, 1024
        $region52: #{tpu_custom_call.1} parent=47 // pred_fallthru
          _
        // Predicated region
        $region53: #{tpu_custom_call.1} parent=47 // pred_check
          %p436 = pneg %p129
        $region54: #{tpu_custom_call.1} parent=47 // pred_check_branch
          %438 = sbr.rel (%p436) target = $region56
        $region55: #{tpu_custom_call.1} parent=47 // pred_region
          %s439 = sand.u32 %s114, 1
          %s440 = scalar_lea.sflag [#allocation9], %s439
          %s441 = sand.u32 %s114, 1
          %s442 = smul.addr %s441, 512
          %s443 = scalar_lea.vmem [#allocation8], %s442
          %445 = dma.done %s440, 8192
        $region56: #{tpu_custom_call.1} parent=47 // pred_fallthru
          _
      $region48: #{tpu_custom_call.1} parent=5 // pred_fallthru
        _
    $region6: #{tpu_custom_call.1} parent=1 // loop_footer
      %s26 = sadd.s32 1, %s22
    $region7: #{tpu_custom_call.1} parent=1 // loop_footer_branch
      %21 = sbr.rel target = $region3
    $region8: #{tpu_custom_call.1} parent=1 // loop_exit
      _
    %446 = vsyncpa [#allocation3], 1
    %s447 = scalar_lea.sflag [#allocation3], 1
    %448 = vsyncpa %s447, 1
    %449 = vsyncpa [#allocation6], 1
    %s450 = scalar_lea.sflag [#allocation6], 1
    %451 = vsyncpa %s450, 1
    %452 = vsyncpa [#allocation4], 1
    %s453 = scalar_lea.sflag [#allocation4], 1
    %454 = vsyncpa %s453, 1
    %455 = vsyncpa [#allocation9], 1
    %s456 = scalar_lea.sflag [#allocation9], 1
    %457 = vsyncpa %s456, 1

</llo_original>
